<compile_context>
chip_gen: v7x
topology: tpu7x:2x2x1
jax: 0.10.0
libtpu: 0.0.40
codegen_flags: <defaults>
</compile_context>

<pallas_src>
import math
import functools

import jax
import jax.numpy as jnp
from jax.experimental import pallas as pl
from jax.experimental.pallas import tpu as pltpu

_INV_SQRT2 = 1.0 / math.sqrt(2.0)


def _mlp_kernel(x_ref, w1_ref, b1_ref, w2_ref, b2_ref, o_ref, acc_ref):
    # x_ref : (tm, C_in)        row tile (native dtype)
    # w1_ref: (C_in, tH)        fc1 weight H-block ([in, out] layout)
    # b1_ref: (1, tH)           fc1 bias H-block
    # w2_ref: (tH, C_out)       fc2 weight H-block
    # b2_ref: (1, C_out)        fc2 bias
    # o_ref : (tm, C_out)       output tile (resident across the H axis)
    # acc_ref: (tm, C_out) f32  VMEM accumulator scratch
    h_idx = pl.program_id(1)

    @pl.when(h_idx == 0)
    def _():
        # Fold fc2 bias into the accumulator init (broadcast over rows).
        acc_ref[...] = jnp.broadcast_to(
            b2_ref[...].astype(jnp.float32), acc_ref.shape)

    # fc1 partial hidden block: native-dtype operands, f32 MXU accumulation.
    h = jnp.dot(x_ref[...], w1_ref[...], preferred_element_type=jnp.float32)
    h = h + b1_ref[...].astype(jnp.float32)

    # exact GELU (erf formulation; matches torch.nn.GELU default).
    h = 0.5 * h * (1.0 + jax.lax.erf(h * _INV_SQRT2))

    # dropout(p=0.0) is identity -> skipped.

    # fc2 partial contribution for this hidden block.
    acc_ref[...] += jnp.dot(h.astype(w2_ref.dtype), w2_ref[...],
                            preferred_element_type=jnp.float32)

    @pl.when(h_idx == pl.num_programs(1) - 1)
    def _():
        o_ref[...] = acc_ref[...].astype(o_ref.dtype)


def _round_up(x, n):
    return ((x + n - 1) // n) * n


@functools.partial(jax.jit, static_argnames=("tm", "th"))
def mlp_pallas(x, w1, b1, w2, b2, *, tm=512, th=512):
    """x: [..., C_in]; w1: [C_in, H]; b1: [H]; w2: [H, C_out]; b2: [C_out]."""
    orig_shape = x.shape
    c_in = orig_shape[-1]
    hidden = w1.shape[1]
    c_out = w2.shape[1]

    x2d = x.reshape(-1, c_in)
    m = x2d.shape[0]

    # Row tile: multiple of 8 (sublane), no larger than (padded) row count.
    tm_eff = min(tm, _round_up(m, 8))
    m_pad = _round_up(m, tm_eff)
    if m_pad != m:
        x2d = jnp.pad(x2d, ((0, m_pad - m), (0, 0)))

    # Hidden tile: full hidden if small / not 128-aligned, else the largest
    # divisor of hidden that is a multiple of 128 and <= th.
    th_eff = hidden
    if hidden > th and hidden % 128 == 0:
        cand = (th // 128) * 128
        while cand >= 128:
            if hidden % cand == 0:
                th_eff = cand
                break
            cand -= 128

    n_row_tiles = m_pad // tm_eff
    n_h_tiles = hidden // th_eff

    b1_2d = b1.reshape(1, hidden)
    b2_2d = b2.reshape(1, c_out)

    # Scoped VMEM budget: double-buffered tiles + f32 accumulator + headroom.
    x_bytes = x2d.dtype.itemsize
    w_bytes = w1.dtype.itemsize
    est = (2 * (tm_eff * c_in + tm_eff * c_out) * x_bytes
           + 2 * (c_in * th_eff + th_eff * c_out) * w_bytes
           + 2 * (th_eff + c_out) * b1.dtype.itemsize
           + tm_eff * c_out * 4)
    vmem_limit = min(max(int(est * 1.5) + (4 << 20), 32 << 20), 64 << 20)

    # Advisory cost estimate for XLA scheduling around the custom call.
    flops = 2 * m_pad * c_in * hidden + 2 * m_pad * hidden * c_out
    bytes_accessed = (m_pad * c_in * x_bytes
                      + (c_in * hidden + hidden * c_out) * w_bytes
                      + (hidden + c_out) * b1.dtype.itemsize
                      + m_pad * c_out * x_bytes)

    out2d = pl.pallas_call(
        _mlp_kernel,
        out_shape=jax.ShapeDtypeStruct((m_pad, c_out), x.dtype),
        grid_spec=pltpu.PrefetchScalarGridSpec(
            num_scalar_prefetch=0,
            grid=(n_row_tiles, n_h_tiles),
            in_specs=[
                pl.BlockSpec((tm_eff, c_in), lambda i, h: (i, 0)),    # x rows
                pl.BlockSpec((c_in, th_eff), lambda i, h: (0, h)),    # fc1 W block
                pl.BlockSpec((1, th_eff), lambda i, h: (0, h)),       # fc1 b block
                pl.BlockSpec((th_eff, c_out), lambda i, h: (h, 0)),   # fc2 W block
                pl.BlockSpec((1, c_out), lambda i, h: (0, 0)),        # fc2 b
            ],
            out_specs=pl.BlockSpec((tm_eff, c_out), lambda i, h: (i, 0)),
            scratch_shapes=[pltpu.VMEM((tm_eff, c_out), jnp.float32)],
        ),
        compiler_params=pltpu.CompilerParams(
            dimension_semantics=("parallel", "arbitrary"),
            vmem_limit_bytes=vmem_limit,
        ),
        cost_estimate=pl.CostEstimate(
            flops=flops,
            transcendentals=m_pad * hidden,
            bytes_accessed=bytes_accessed,
        ),
    )(x2d, w1, b1_2d, w2, b2_2d)

    out2d = out2d[:m]
    return out2d.reshape(*orig_shape[:-1], c_out)


def _reference_mlp(x, w1, b1, w2, b2):
    h = jnp.dot(x, w1) + b1
    h = 0.5 * h * (1.0 + jax.lax.erf(h / jnp.sqrt(2.0)))
    return jnp.dot(h, w2) + b2


def _make_params(key, c_in, hidden, c_out):
    kw1, kb1, kw2, kb2 = jax.random.split(key, 4)
    # nn.Linear-like uniform init, stored as [in, out] (x @ W == torch x @ W.T).
    lim1 = 1.0 / math.sqrt(c_in)
    w1 = jax.random.uniform(kw1, (c_in, hidden), jnp.float32, -lim1, lim1)
    b1 = jax.random.uniform(kb1, (hidden,), jnp.float32, -lim1, lim1)
    lim2 = 1.0 / math.sqrt(hidden)
    w2 = jax.random.uniform(kw2, (hidden, c_out), jnp.float32, -lim2, lim2)
    b2 = jax.random.uniform(kb2, (c_out,), jnp.float32, -lim2, lim2)
    return w1, b1, w2, b2


if __name__ == "__main__":
    key = jax.random.PRNGKey(0)
    k1, k2, kx1, kx2 = jax.random.split(key, 4)

    # --- Test 1: small shapes consistent with the module: tokens [B, N, C] ---
    B, N, c_in, hidden, c_out = 2, 8, 16, 32, 16
    x = jax.random.normal(kx1, (B, N, c_in), dtype=jnp.float32)
    w1, b1, w2, b2 = _make_params(k1, c_in, hidden, c_out)

    out = jax.block_until_ready(mlp_pallas(x, w1, b1, w2, b2))
    ref = _reference_mlp(x, w1, b1, w2, b2)
    assert out.shape == (B, N, c_out)
    assert jnp.allclose(out, ref, atol=1e-5, rtol=1e-5), "mismatch vs reference (small)"

    # --- Test 2: exercises row padding (m=393) and hidden-dim tiling (H=1024) ---
    B2, N2, c_in2, hidden2, c_out2 = 3, 131, 64, 1024, 64
    x2 = jax.random.normal(kx2, (B2, N2, c_in2), dtype=jnp.float32)
    w1b, b1b, w2b, b2b = _make_params(k2, c_in2, hidden2, c_out2)

    out2 = jax.block_until_ready(mlp_pallas(x2, w1b, b1b, w2b, b2b))
    ref2 = _reference_mlp(x2, w1b, b1b, w2b, b2b)
    assert out2.shape == (B2, N2, c_out2)
    assert jnp.allclose(out2, ref2, atol=1e-3, rtol=1e-3), "mismatch vs reference (tiled)"

    print("KERNEL_OK")
</pallas_src>

<mosaic_0001>
module attributes {stable_mosaic.version = 11 : i64} {
  func.func @_mlp_kernel(%arg0: i32, %arg1: i32, %arg2: memref<16x16xf32, #tpu.memory_space<vmem>>, %arg3: memref<16x32xf32, #tpu.memory_space<vmem>>, %arg4: memref<1x32xf32, #tpu.memory_space<vmem>>, %arg5: memref<32x16xf32, #tpu.memory_space<vmem>>, %arg6: memref<1x16xf32, #tpu.memory_space<vmem>>, %arg7: memref<16x16xf32, #tpu.memory_space<vmem>>, %arg8: memref<16x16xf32, #tpu.memory_space<vmem>>) attributes {dimension_semantics = [#tpu.dimension_semantics<parallel>, #tpu.dimension_semantics<arbitrary>], iteration_bounds = array<i64: 1, 1>, scalar_prefetch = 0 : i64, scratch_operands = 1 : i64, tpu.core_type = #tpu.core_type<tc>, window_params = [{transform_indices = @transform_0, window_bounds = array<i64: 16, 16>}, {transform_indices = @transform_1, window_bounds = array<i64: 16, 32>}, {transform_indices = @transform_2, window_bounds = array<i64: 1, 32>}, {transform_indices = @transform_3, window_bounds = array<i64: 32, 16>}, {pipeline_mode = #tpu.pipeline_mode<synchronous>, transform_indices = @transform_4, window_bounds = array<i64: 1, 16>}, {transform_indices = @transform_5, window_bounds = array<i64: 16, 16>}]} {
    %c0_i32 = arith.constant 0 : i32
    %0 = arith.cmpi eq, %arg1, %c0_i32 : i32
    %1 = arith.extui %0 : i1 to i32
    %c0_i32_0 = arith.constant 0 : i32
    %2 = arith.cmpi ne, %1, %c0_i32_0 : i32
    scf.if %2 {
      %c0_18 = arith.constant 0 : index
      %c0_19 = arith.constant 0 : index
      %25 = vector.load %arg6[%c0_18, %c0_19] : memref<1x16xf32, #tpu.memory_space<vmem>>, vector<1x16xf32>
      %26 = vector.shape_cast %25 : vector<1x16xf32> to vector<1x16xf32>
      %27 = vector.broadcast %26 : vector<1x16xf32> to vector<16x16xf32>
      %c0_20 = arith.constant 0 : index
      %c0_21 = arith.constant 0 : index
      %28 = vector.load %arg8[%c0_20, %c0_21] : memref<16x16xf32, #tpu.memory_space<vmem>>, vector<16x16xf32>
      tpu.vector_store %arg8[%c0_20, %c0_21], %27 {strides = array<i32>} : memref<16x16xf32, #tpu.memory_space<vmem>>, vector<16x16xf32>,
    } else {
    }
    %c0 = arith.constant 0 : index
    %c0_1 = arith.constant 0 : index
    %3 = vector.load %arg2[%c0, %c0_1] : memref<16x16xf32, #tpu.memory_space<vmem>>, vector<16x16xf32>
    %c0_2 = arith.constant 0 : index
    %c0_3 = arith.constant 0 : index
    %4 = vector.load %arg3[%c0_2, %c0_3] : memref<16x32xf32, #tpu.memory_space<vmem>>, vector<16x32xf32>
    %cst = arith.constant dense<0.000000e+00> : vector<16x32xf32>
    %5 = tpu.matmul %3, %4, %cst {dimension_numbers = #tpu.dot_dimension_numbers<[1], [0], [0], [1], [0, 0, 1, 1], [], []>} : vector<16x16xf32>, vector<16x32xf32>, vector<16x32xf32> -> vector<16x32xf32>
    %c0_4 = arith.constant 0 : index
    %c0_5 = arith.constant 0 : index
    %6 = vector.load %arg4[%c0_4, %c0_5] : memref<1x32xf32, #tpu.memory_space<vmem>>, vector<1x32xf32>
    %7 = vector.broadcast %6 : vector<1x32xf32> to vector<16x32xf32>
    %8 = arith.addf %5, %7 : vector<16x32xf32>
    %cst_6 = arith.constant 5.000000e-01 : f32
    %9 = vector.broadcast %cst_6 : f32 to vector<16x32xf32>
    %10 = arith.mulf %9, %8 : vector<16x32xf32>
    %cst_7 = arith.constant 0.707106769 : f32
    %11 = vector.broadcast %cst_7 : f32 to vector<16x32xf32>
    %12 = arith.mulf %8, %11 : vector<16x32xf32>
    %13 = math.erf %12 : vector<16x32xf32>
    %cst_8 = arith.constant 1.000000e+00 : f32
    %14 = vector.broadcast %cst_8 : f32 to vector<16x32xf32>
    %15 = arith.addf %14, %13 : vector<16x32xf32>
    %16 = arith.mulf %10, %15 : vector<16x32xf32>
    %c0_9 = arith.constant 0 : index
    %c0_10 = arith.constant 0 : index
    %17 = vector.load %arg8[%c0_9, %c0_10] : memref<16x16xf32, #tpu.memory_space<vmem>>, vector<16x16xf32>
    %c0_11 = arith.constant 0 : index
    %c0_12 = arith.constant 0 : index
    %18 = vector.load %arg5[%c0_11, %c0_12] : memref<32x16xf32, #tpu.memory_space<vmem>>, vector<32x16xf32>
    %cst_13 = arith.constant dense<0.000000e+00> : vector<16x16xf32>
    %19 = tpu.matmul %16, %18, %cst_13 {dimension_numbers = #tpu.dot_dimension_numbers<[1], [0], [0], [1], [0, 0, 1, 1], [], []>} : vector<16x32xf32>, vector<32x16xf32>, vector<16x16xf32> -> vector<16x16xf32>
    %20 = arith.addf %17, %19 : vector<16x16xf32>
    %c0_14 = arith.constant 0 : index
    %c0_15 = arith.constant 0 : index
    %21 = vector.load %arg8[%c0_14, %c0_15] : memref<16x16xf32, #tpu.memory_space<vmem>>, vector<16x16xf32>
    tpu.vector_store %arg8[%c0_14, %c0_15], %20 {strides = array<i32>} : memref<16x16xf32, #tpu.memory_space<vmem>>, vector<16x16xf32>,
    %c0_i32_16 = arith.constant 0 : i32
    %22 = arith.cmpi eq, %arg1, %c0_i32_16 : i32
    %23 = arith.extui %22 : i1 to i32
    %c0_i32_17 = arith.constant 0 : i32
    %24 = arith.cmpi ne, %23, %c0_i32_17 : i32
    scf.if %24 {
      %c0_18 = arith.constant 0 : index
      %c0_19 = arith.constant 0 : index
      %25 = vector.load %arg8[%c0_18, %c0_19] : memref<16x16xf32, #tpu.memory_space<vmem>>, vector<16x16xf32>
      %c0_20 = arith.constant 0 : index
      %c0_21 = arith.constant 0 : index
      %26 = vector.load %arg7[%c0_20, %c0_21] : memref<16x16xf32, #tpu.memory_space<vmem>>, vector<16x16xf32>
      tpu.vector_store %arg7[%c0_20, %c0_21], %25 {strides = array<i32>} : memref<16x16xf32, #tpu.memory_space<vmem>>, vector<16x16xf32>,
    } else {
    }
    return
  }
  func.func @transform_0(%arg0: i32, %arg1: i32) -> (i32, i32) {
    %c0_i32 = arith.constant 0 : i32
    %c0_i32_0 = arith.constant 0 : i32
    return %arg0, %c0_i32 : i32, i32
  }
  func.func @transform_1(%arg0: i32, %arg1: i32) -> (i32, i32) {
    %c0_i32 = arith.constant 0 : i32
    %c0_i32_0 = arith.constant 0 : i32
    return %c0_i32, %arg1 : i32, i32
  }
  func.func @transform_2(%arg0: i32, %arg1: i32) -> (i32, i32) {
    %c0_i32 = arith.constant 0 : i32
    %c0_i32_0 = arith.constant 0 : i32
    return %c0_i32, %arg1 : i32, i32
  }
  func.func @transform_3(%arg0: i32, %arg1: i32) -> (i32, i32) {
    %c0_i32 = arith.constant 0 : i32
    %c0_i32_0 = arith.constant 0 : i32
    return %arg1, %c0_i32 : i32, i32
  }
  func.func @transform_4(%arg0: i32, %arg1: i32) -> (i32, i32) {
    %c0_i32 = arith.constant 0 : i32
    %c0_i32_0 = arith.constant 0 : i32
    %c0_i32_1 = arith.constant 0 : i32
    return %c0_i32, %c0_i32_0 : i32, i32
  }
  func.func @transform_5(%arg0: i32, %arg1: i32) -> (i32, i32) {
    %c0_i32 = arith.constant 0 : i32
    %c0_i32_0 = arith.constant 0 : i32
    return %arg0, %c0_i32 : i32, i32
  }
}

</mosaic_0001>

<llo_original>
// kernel: mlp_pallas.1
$region0: #{mlp_pallas.1}
  #allocation0 [shape = 'u32[]', space=smem, size = 0x4, offset = 0x4, fixed_abs, tag = 'smem constant byte address 0x4 - core index']
  #allocation1 [shape = 'u32[144,128]{1,0:T(1,128)}', space=vmem, size = 0x12000, scoped, tag = 'internal scratch']
  #allocation2 [shape = 'f32[16,16]{1,0:T(8,128)}', space=vmem, size = 0x2000, scoped, tag = 'scratch operand']
  %s0 = inlined_call_operand.vmem [shape: f32[16,16], index: 0, kind: input, shape index: {}]
  %s1 = inlined_call_operand.vmem [shape: f32[16,32], index: 1, kind: input, shape index: {}]
  %s2 = inlined_call_operand.vmem [shape: f32[1,32], index: 2, kind: input, shape index: {}]
  %s3 = inlined_call_operand.vmem [shape: f32[32,16], index: 3, kind: input, shape index: {}]
  %s4 = inlined_call_operand.vmem [shape: f32[1,16], index: 4, kind: input, shape index: {}]
  %s5 = inlined_call_operand.hbm [shape: f32[16,16], index: 5, kind: output, shape index: {}]
  %s6 = sld [smem:[#allocation0]]
  $region38: #{mlp_pallas.1} parent=0
    _
  %s8 = ssub.s32 1, %s6
  %s9 = scalar_select 0, %s8, %s6
  $region1: #{mlp_pallas.1} parent=0
    #allocation3 [shape = 'u8[8192]{0}', space=vmem, size = 0x2000, scoped, tag = 'output window, operand 0, single buffered']
    #allocation4 [shape = 's32[1]{0}', space=sflag, size = 0x4, scoped, tag = 'scoped memory for mlp_pallas.1']
    %10 = vsyncpa [#allocation4], 0
    // Predicated region
    $region2: #{mlp_pallas.1} parent=1 // pred_check
      _
    $region3: #{mlp_pallas.1} parent=1 // pred_check_branch
      %12 = sbr.rel (0) target = $region5
    $region4: #{mlp_pallas.1} parent=1 // pred_region
      _
    $region5: #{mlp_pallas.1} parent=1 // pred_fallthru
      _
    // Predicated region
    $region6: #{mlp_pallas.1} parent=1 // pred_check
      _
    $region7: #{mlp_pallas.1} parent=1 // pred_check_branch
      %14 = sbr.rel (0) target = $region9
    $region8: #{mlp_pallas.1} parent=1 // pred_region
      _
    $region9: #{mlp_pallas.1} parent=1 // pred_fallthru
      _
    // Predicated region
    $region10: #{mlp_pallas.1} parent=1 // pred_check
      _
    $region11: #{mlp_pallas.1} parent=1 // pred_check_branch
      %16 = sbr.rel (0) target = $region13
    $region12: #{mlp_pallas.1} parent=1 // pred_region
      _
    $region13: #{mlp_pallas.1} parent=1 // pred_fallthru
      _
    // Predicated region
    $region14: #{mlp_pallas.1} parent=1 // pred_check
      _
    $region15: #{mlp_pallas.1} parent=1 // pred_check_branch
      %18 = sbr.rel (0) target = $region17
    $region16: #{mlp_pallas.1} parent=1 // pred_region
      _
    $region17: #{mlp_pallas.1} parent=1 // pred_fallthru
      _
    // Predicated region
    $region18: #{mlp_pallas.1} parent=1 // pred_check
      _
    $region19: #{mlp_pallas.1} parent=1 // pred_check_branch
      %20 = sbr.rel (0) target = $region21
    $region20: #{mlp_pallas.1} parent=1 // pred_region
      _
    $region21: #{mlp_pallas.1} parent=1 // pred_fallthru
      _
    %p21 = scmp.eq.s32.totalorder 0, 0
    // Predicated region
    $region22: #{mlp_pallas.1} parent=1 // pred_check
      %p22 = pneg %p21
    $region23: #{mlp_pallas.1} parent=1 // pred_check_branch
      %24 = sbr.rel (%p22) target = $region25
    $region24: #{mlp_pallas.1} parent=1 // pred_region
      %v25 = vld [vmem:[%s4] sm:$0x1]
      %v27 = vlaneseq
      %v28 = vshrl.u32 %v27, 7
      %v29 = vsub.s32 0, %v28
      %v30 = vrot.slane %v25, %v29
      %vm32 = vcmask 130048
      %33 = vst.msk [vmem:[#allocation2] sm:$0xff] %vm32, %v30
      %34 = vst.msk [vmem:[#allocation2 + $0x8] sm:$0xff] %vm32, %v30
    $region25: #{mlp_pallas.1} parent=1 // pred_fallthru
      _
    %v35 = vld [vmem:[%s0] sm:$0xff]
    %v36 = vld [vmem:[%s0 + $0x8] sm:$0xff]
    %v37 = vld [vmem:[%s1] sm:$0xff]
    %v38 = vld [vmem:[%s1 + $0x8] sm:$0xff]
    %v39 = vld [vmem:[%s2] sm:$0x1]
    %v41 = vlaneseq
    %v42 = vshrl.u32 %v41, 7
    %v43 = vsub.s32 0, %v42
    %v44 = vrot.slane %v39, %v43
    %vm46 = vcmask 130048
    %v48 = vsel %vm46, %v35, 0
    %v51 = vsel %vm46, %v36, 0
    %53 = vmatprep.subr.mxu0 0.0
    %54 = vmatpush1.msra.mxu0 %v37
    %55 = vmatprep.subr.mxu0 0.0
    %56 = vmatpush1.msra.mxu0 %v38
    %57 = vmatprep.subr.mxu0 0.0
    %58 = vmatpush1.msra.mxu0 0.0
    %59 = vmatprep.subr.mxu0 0.0
    %60 = vmatpush1.msra.mxu0 0.0
    %61 = vmatprep.subr.mxu0 0.0
    %62 = vmatpush1.msra.mxu0 0.0
    %63 = vmatprep.subr.mxu0 0.0
    %64 = vmatpush1.msra.mxu0 0.0
    %65 = vmatprep.subr.mxu0 0.0
    %66 = vmatpush1.msra.mxu0 0.0
    %67 = vmatprep.subr.mxu0 0.0
    %68 = vmatpush1.msra.mxu0 0.0
    %69 = vmatprep.subr.mxu0 0.0
    %70 = vmatpush1.msra.mxu0 0.0
    %71 = vmatprep.subr.mxu0 0.0
    %72 = vmatpush1.msra.mxu0 0.0
    %73 = vmatprep.subr.mxu0 0.0
    %74 = vmatpush1.msra.mxu0 0.0
    %75 = vmatprep.subr.mxu0 0.0
    %76 = vmatpush1.msra.mxu0 0.0
    %77 = vmatprep.subr.mxu0 0.0
    %78 = vmatpush1.msra.mxu0 0.0
    %79 = vmatprep.subr.mxu0 0.0
    %80 = vmatpush1.msra.mxu0 0.0
    %81 = vmatprep.subr.mxu0 0.0
    %82 = vmatpush1.msra.mxu0 0.0
    %83 = vmatprep.subr.mxu0 0.0
    %84 = vmatpush1.msra.mxu0 0.0
    %85 = vmatprep.subr.mxu0 0.0
    %86 = vmatpush1.msra.mxu0 0.0
    %87 = vmatprep.subr.mxu0 0.0
    %88 = vmatpush1.msra.mxu0 0.0
    %89 = vmatprep.subr.mxu0 0.0
    %90 = vmatpush1.msra.mxu0 0.0
    %91 = vmatprep.subr.mxu0 0.0
    %92 = vmatpush1.msra.mxu0 0.0
    %93 = vmatprep.subr.mxu0 0.0
    %94 = vmatpush1.msra.mxu0 0.0
    %95 = vmatprep.subr.mxu0 0.0
    %96 = vmatpush1.msra.mxu0 0.0
    %97 = vmatprep.subr.mxu0 0.0
    %98 = vmatpush1.msra.mxu0 0.0
    %99 = vmatprep.subr.mxu0 0.0
    %100 = vmatpush1.msra.mxu0 0.0
    %101 = vmatprep.subr.mxu0 0.0
    %102 = vmatpush1.msra.mxu0 0.0
    %103 = vmatprep.subr.mxu0 0.0
    %104 = vmatpush1.msra.mxu0 0.0
    %105 = vmatprep.subr.mxu0 0.0
    %106 = vmatpush1.msra.mxu0 0.0
    %107 = vmatprep.subr.mxu0 0.0
    %108 = vmatpush1.msra.mxu0 0.0
    %109 = vmatprep.subr.mxu0 0.0
    %110 = vmatpush1.msra.mxu0 0.0
    %111 = vmatprep.subr.mxu0 0.0
    %112 = vmatpush1.msra.mxu0 0.0
    %113 = vmatprep.subr.mxu0 0.0
    %114 = vmatpush1.msra.mxu0 0.0
    %115 = vmatprep.subr.mxu0 0.0
    %116 = vmatpush1.msra.mxu0 0.0
    %117 = vmatprep.mubr.f32.mxu0 0.0
    %118 = vmatmul.mubr.f32.gmra.mrb[0].mxu0 %v48
    %v119 = vpop.f32.mrb[0].mxu0
    %v120 = vadd.f32 %v44, %v119
    %v121 = vpop.f32.mrb[0].mxu0
    %122 = vmatprep.mubr.f32.mxu0 0.0
    %123 = vmatmul.mubr.f32.gmra.mrb[0].mxu0 %v51
    %v124 = vpop.f32.mrb[0].mxu0
    %v125 = vadd.f32 %v44, %v124
    %v126 = vpop.f32.mrb[0].mxu0
    %127 = vdwg.mxu0
    %v128 = vmul.f32 %v120, 0.5
    %v129 = vmul.f32 %v125, 0.5
    %v130 = vmul.f32 %v120, 0.70710677
    %v131 = vmul.f32 %v125, 0.70710677
    %v132 = verf.f32.pop %v130
    %v133 = verf.f32.pop %v131
    %v134 = vadd.f32 %v132, 1.0
    %v135 = vadd.f32 %v133, 1.0
    %v136 = vmul.f32 %v128, %v134
    %v137 = vmul.f32 %v129, %v135
    %v138 = vld [vmem:[#allocation2] sm:$0xff]
    %v139 = vld [vmem:[#allocation2 + $0x8] sm:$0xff]
    %v140 = vld [vmem:[%s3] sm:$0xff]
    %v141 = vld [vmem:[%s3 + $0x8] sm:$0xff]
    %v142 = vld [vmem:[%s3 + $0x10] sm:$0xff]
    %v143 = vld [vmem:[%s3 + $0x18] sm:$0xff]
    %vm144 = vcmask 261120
    %v146 = vsel %vm144, %v136, 0
    %v149 = vsel %vm144, %v137, 0
    %151 = vmatprep.subr.mxu0 0.0
    %152 = vmatpush1.msra.mxu0 %v140
    %153 = vmatprep.subr.mxu0 0.0
    %154 = vmatpush1.msra.mxu0 %v141
    %155 = vmatprep.subr.mxu0 0.0
    %156 = vmatpush1.msra.mxu0 %v142
    %157 = vmatprep.subr.mxu0 0.0
    %158 = vmatpush1.msra.mxu0 %v143
    %159 = vmatprep.subr.mxu0 0.0
    %160 = vmatpush1.msra.mxu0 0.0
    %161 = vmatprep.subr.mxu0 0.0
    %162 = vmatpush1.msra.mxu0 0.0
    %163 = vmatprep.subr.mxu0 0.0
    %164 = vmatpush1.msra.mxu0 0.0
    %165 = vmatprep.subr.mxu0 0.0
    %166 = vmatpush1.msra.mxu0 0.0
    %167 = vmatprep.subr.mxu0 0.0
    %168 = vmatpush1.msra.mxu0 0.0
    %169 = vmatprep.subr.mxu0 0.0
    %170 = vmatpush1.msra.mxu0 0.0
    %171 = vmatprep.subr.mxu0 0.0
    %172 = vmatpush1.msra.mxu0 0.0
    %173 = vmatprep.subr.mxu0 0.0
    %174 = vmatpush1.msra.mxu0 0.0
    %175 = vmatprep.subr.mxu0 0.0
    %176 = vmatpush1.msra.mxu0 0.0
    %177 = vmatprep.subr.mxu0 0.0
    %178 = vmatpush1.msra.mxu0 0.0
    %179 = vmatprep.subr.mxu0 0.0
    %180 = vmatpush1.msra.mxu0 0.0
    %181 = vmatprep.subr.mxu0 0.0
    %182 = vmatpush1.msra.mxu0 0.0
    %183 = vmatprep.subr.mxu0 0.0
    %184 = vmatpush1.msra.mxu0 0.0
    %185 = vmatprep.subr.mxu0 0.0
    %186 = vmatpush1.msra.mxu0 0.0
    %187 = vmatprep.subr.mxu0 0.0
    %188 = vmatpush1.msra.mxu0 0.0
    %189 = vmatprep.subr.mxu0 0.0
    %190 = vmatpush1.msra.mxu0 0.0
    %191 = vmatprep.subr.mxu0 0.0
    %192 = vmatpush1.msra.mxu0 0.0
    %193 = vmatprep.subr.mxu0 0.0
    %194 = vmatpush1.msra.mxu0 0.0
    %195 = vmatprep.subr.mxu0 0.0
    %196 = vmatpush1.msra.mxu0 0.0
    %197 = vmatprep.subr.mxu0 0.0
    %198 = vmatpush1.msra.mxu0 0.0
    %199 = vmatprep.subr.mxu0 0.0
    %200 = vmatpush1.msra.mxu0 0.0
    %201 = vmatprep.subr.mxu0 0.0
    %202 = vmatpush1.msra.mxu0 0.0
    %203 = vmatprep.subr.mxu0 0.0
    %204 = vmatpush1.msra.mxu0 0.0
    %205 = vmatprep.subr.mxu0 0.0
    %206 = vmatpush1.msra.mxu0 0.0
    %207 = vmatprep.subr.mxu0 0.0
    %208 = vmatpush1.msra.mxu0 0.0
    %209 = vmatprep.subr.mxu0 0.0
    %210 = vmatpush1.msra.mxu0 0.0
    %211 = vmatprep.subr.mxu0 0.0
    %212 = vmatpush1.msra.mxu0 0.0
    %213 = vmatprep.subr.mxu0 0.0
    %214 = vmatpush1.msra.mxu0 0.0
    %215 = vmatprep.mubr.f32.mxu0 0.0
    %216 = vmatmul.mubr.f32.gmra.mrb[0].mxu0 %v146
    %v217 = vpop.f32.mrb[0].mxu0
    %v218 = vadd.f32 0.0, %v217
    %v219 = vpop.f32.mrb[0].mxu0
    %220 = vmatprep.mubr.f32.mxu0 0.0
    %221 = vmatmul.mubr.f32.gmra.mrb[0].mxu0 %v149
    %v222 = vpop.f32.mrb[0].mxu0
    %v223 = vadd.f32 0.0, %v222
    %v224 = vpop.f32.mrb[0].mxu0
    %225 = vdwg.mxu0
    %v226 = vadd.f32 %v138, %v218
    %v227 = vadd.f32 %v139, %v223
    %228 = vst.msk [vmem:[#allocation2] sm:$0xff] %vm46, %v226
    %229 = vst.msk [vmem:[#allocation2 + $0x8] sm:$0xff] %vm46, %v227
    // Predicated region
    $region26: #{mlp_pallas.1} parent=1 // pred_check
      %p230 = pneg %p21
    $region27: #{mlp_pallas.1} parent=1 // pred_check_branch
      %232 = sbr.rel (%p230) target = $region29
    $region28: #{mlp_pallas.1} parent=1 // pred_region
      %v233 = vld [vmem:[#allocation2] sm:$0xff]
      %v234 = vld [vmem:[#allocation2 + $0x8] sm:$0xff]
      %235 = vst.msk [vmem:[#allocation3] sm:$0xff] %vm46, %v233
      %236 = vst.msk [vmem:[#allocation3 + $0x8] sm:$0xff] %vm46, %v234
    $region29: #{mlp_pallas.1} parent=1 // pred_fallthru
      _
    // Predicated region
    $region30: #{mlp_pallas.1} parent=1 // pred_check
      _
    $region31: #{mlp_pallas.1} parent=1 // pred_check_branch
      %238 = sbr.rel (0) target = $region33
    $region32: #{mlp_pallas.1} parent=1 // pred_region
      %s240 = ssub.s32 256, 256
      %241 = vsyncadd [#allocation4], %s240
      %s242 = sshll.u32 [#allocation3], 4
      %s243 = int_to_ptr.vmem [resolvable:$true] %s242
      %248 = dma.vmem_to_hbm [thread:$0]  %s243, 256, %s5, [#allocation4], 128, 128, 8
    $region33: #{mlp_pallas.1} parent=1 // pred_fallthru
      _
    // Predicated region
    $region34: #{mlp_pallas.1} parent=1 // pred_check
      _
    $region35: #{mlp_pallas.1} parent=1 // pred_check_branch
      %250 = sbr.rel (0) target = $region37
    $region36: #{mlp_pallas.1} parent=1 // pred_region
      %251 = dma.done [#allocation4], 256
    $region37: #{mlp_pallas.1} parent=1 // pred_fallthru
      _
    %252 = vsyncpa [#allocation4], 1

</llo_original>
